<compile_context>
chip_gen: v6e
topology: v6e:2x2x1
jax: 0.10.0
libtpu: 0.0.40
codegen_flags: <defaults>
</compile_context>

<pallas_src>
import functools
import math

import jax
import jax.numpy as jnp
import numpy as np
from jax import lax
from jax.experimental import pallas as pl
from jax.experimental.pallas import tpu as pltpu


def _round_up(x: int, m: int) -> int:
    return (x + m - 1) // m * m


# ---------------------------------------------------------------------------
# Kernel 1: fused qkv projection -> head-major q, k, v.
# ---------------------------------------------------------------------------
def _qkv_proj_kernel(x_ref, w_ref, b_ref, q_ref, k_ref, v_ref, *, head_dim):
    """One (batch, seq-tile, head) grid point.

    x_ref : (1, tt, C)         input tile (block index independent of head ->
                               fetched once per (b, seq-tile))
    w_ref : (nh, C, 3*hd)      ALL heads' packed [Wq|Wk|Wv] (VMEM-resident)
    b_ref : (nh, 1, 3*hd)      ALL heads' packed bias (VMEM-resident)
    q/k/v : (1, 1, tt, hd)     head-major outputs
    """
    hd = head_dim
    h = pl.program_id(2)
    x = x_ref[0]                                      # (tt, C), input dtype
    w = w_ref[h]                                      # (C, 3*hd)
    b = b_ref[h]                                      # (1, 3*hd)
    qkv = jnp.dot(x, w, preferred_element_type=jnp.float32)
    qkv = qkv + b.astype(jnp.float32)                 # (tt, 3*hd)
    q_ref[0, 0] = qkv[:, 0 * hd:1 * hd].astype(q_ref.dtype)
    k_ref[0, 0] = qkv[:, 1 * hd:2 * hd].astype(k_ref.dtype)
    v_ref[0, 0] = qkv[:, 2 * hd:3 * hd].astype(v_ref.dtype)


# ---------------------------------------------------------------------------
# Kernel 2: flash attention with online softmax + fused output projection.
# ---------------------------------------------------------------------------
def _flash_attn_kernel(q_ref, k_ref, v_ref, wproj_ref, bproj_ref, o_ref,
                       m_ref, l_ref, acc_ref, oacc_ref,
                       *, q_tile, kv_tile, n_head, head_dim):
    """Grid: (B, q-tiles, heads, kv-tiles); heads & kv are revisit axes.

    q_ref     : (1, 1, tq, hd)   (q already carries the 1/sqrt(hd) scale)
    k_ref     : (1, 1, tk, hd)   (kv index clamped in the index_map: skipped
    v_ref     : (1, 1, tk, hd)    causal tiles issue no DMA)
    wproj_ref : (C, C)           full W_proj, VMEM-resident
    bproj_ref : (1, C)           VMEM-resident
    o_ref     : (1, tq, C)
    scratch   : m (tq,1), l (tq,1), acc (tq,hd), oacc (tq,C)  -- all f32
    """
    qi = pl.program_id(1)
    h = pl.program_id(2)
    ki = pl.program_id(3)
    q_start = qi * q_tile
    kv_start = ki * kv_tile
    q_last = q_start + q_tile - 1
    kv_last = kv_start + kv_tile - 1

    @pl.when(ki == 0)
    def _init():
        m_ref[...] = jnp.full_like(m_ref, -jnp.inf)
        l_ref[...] = jnp.zeros_like(l_ref)
        acc_ref[...] = jnp.zeros_like(acc_ref)

    def _step(apply_mask):
        q = q_ref[0, 0]                               # (tq, hd)
        k = k_ref[0, 0]                               # (tk, hd)
        v = v_ref[0, 0]                               # (tk, hd)
        # q @ k^T without materializing a transpose.
        s = lax.dot_general(q, k, (((1,), (1,)), ((), ())),
                            preferred_element_type=jnp.float32)   # (tq, tk)
        if apply_mask:
            row = q_start + lax.broadcasted_iota(jnp.int32,
                                                 (q_tile, kv_tile), 0)
            col = kv_start + lax.broadcasted_iota(jnp.int32,
                                                  (q_tile, kv_tile), 1)
            s = jnp.where(row >= col, s, jnp.float32(-1e30))

        m_prev = m_ref[...]
        m_new = jnp.maximum(m_prev, jnp.max(s, axis=-1, keepdims=True))
        alpha = jnp.exp(m_prev - m_new)
        p = jnp.exp(s - m_new)                        # (tq, tk), f32
        l_ref[...] = alpha * l_ref[...] + jnp.sum(p, axis=-1, keepdims=True)
        acc_ref[...] = alpha * acc_ref[...] + jnp.dot(
            p.astype(v.dtype), v, preferred_element_type=jnp.float32)
        m_ref[...] = m_new

    # Fully-below-diagonal tiles: unmasked fast path (no iota/compare/where).
    @pl.when(kv_last <= q_start)
    def _unmasked():
        _step(False)

    # Diagonal-straddling tiles: masked path.  Fully-above-diagonal tiles are
    # skipped entirely (and their K/V DMA is skipped via the clamped index_map).
    @pl.when(jnp.logical_and(kv_start <= q_last, kv_last > q_start))
    def _masked():
        _step(True)

    @pl.when(ki == pl.num_programs(3) - 1)
    def _finish_head():
        hd = head_dim
        # Exact normalization (runs once per head per q-tile; cost negligible).
        y_h = acc_ref[...] / l_ref[...]                             # (tq, hd)
        w_h = wproj_ref[pl.ds(pl.multiple_of(h * hd, hd), hd), :]   # (hd, C)
        partial = jnp.dot(y_h.astype(w_h.dtype), w_h,
                          preferred_element_type=jnp.float32)       # (tq, C)

        @pl.when(h == 0)
        def _():
            oacc_ref[...] = partial + bproj_ref[...].astype(jnp.float32)

        @pl.when(h != 0)
        def _():
            oacc_ref[...] = oacc_ref[...] + partial

        @pl.when(h == n_head - 1)
        def _():
            o_ref[0] = oacc_ref[...].astype(o_ref.dtype)


# ---------------------------------------------------------------------------
# Wrapper
# ---------------------------------------------------------------------------
def causal_self_attention(x, w_qkv, b_qkv, w_proj, b_proj, *, n_head,
                          seq_tile: int = 256):
    """x: (B, T, C) -> (B, T, C).  Weights stored as (in, out): y = x @ W + b."""
    B, T, C = x.shape
    assert C % n_head == 0
    hd = C // n_head
    assert hd % 8 == 0, "head_dim must be a multiple of 8 for the TPU layout"

    dtype = x.dtype
    itemsize = jnp.dtype(dtype).itemsize
    scale = 1.0 / math.sqrt(hd)

    # ---- trace-time weight re-packing (layout plumbing, not compute) ----
    # Fold the 1/sqrt(hd) softmax scale into the q projection.
    wq = w_qkv[:, 0 * C:1 * C] * scale
    wk = w_qkv[:, 1 * C:2 * C]
    wv = w_qkv[:, 2 * C:3 * C]
    bq = b_qkv[0 * C:1 * C] * scale
    bk = b_qkv[1 * C:2 * C]
    bv = b_qkv[2 * C:3 * C]

    def per_head(w):                                  # (C, C) -> (nh, C, hd)
        return jnp.transpose(w.reshape(C, n_head, hd), (1, 0, 2))

    w_heads = jnp.concatenate([per_head(wq), per_head(wk), per_head(wv)],
                              axis=-1)                # (nh, C, 3*hd)
    b_heads = jnp.concatenate([bq.reshape(n_head, 1, hd),
                               bk.reshape(n_head, 1, hd),
                               bv.reshape(n_head, 1, hd)],
                              axis=-1)                # (nh, 1, 3*hd)
    b_proj2 = b_proj.reshape(1, C)

    # ---- sequence tiling: pad T up to a lane/MXU-friendly tile ----
    tile = min(seq_tile, _round_up(T, 8))
    T_pad = _round_up(T, tile)
    if T_pad != T:
        # Padded rows sit after all valid rows; causality ensures they never
        # influence valid outputs, and they are sliced away at the end.
        x = jnp.pad(x, ((0, 0), (0, T_pad - T), (0, 0)))

    tt = tq = tk = tile
    nt = T_pad // tt
    nq = T_pad // tq
    nkv = T_pad // tk

    w_itemsize = jnp.dtype(w_qkv.dtype).itemsize

    # ---- kernel 1: qkv projection -> head-major q, k, v ----
    k1_resident = (w_heads.size + b_heads.size) * w_itemsize
    k1_stream = 2 * (tt * C + 3 * tt * hd) * itemsize          # double-buffered
    vmem1 = int(min(max((k1_resident + k1_stream) * 2, 32 << 20), 56 << 20))
    qkv_cost = pl.CostEstimate(
        flops=2 * B * T_pad * C * 3 * C,
        transcendentals=0,
        bytes_accessed=int(itemsize * 4 * B * T_pad * C + k1_resident))
    head_shape = jax.ShapeDtypeStruct((B, n_head, T_pad, hd), dtype)
    q, k, v = pl.pallas_call(
        functools.partial(_qkv_proj_kernel, head_dim=hd),
        out_shape=(head_shape, head_shape, head_shape),
        grid_spec=pltpu.PrefetchScalarGridSpec(
            num_scalar_prefetch=0,
            grid=(B, nt, n_head),
            in_specs=[
                # x tile: index independent of head (innermost) -> one DMA
                # per (batch, seq-tile).
                pl.BlockSpec((1, tt, C), lambda b, i, h: (b, i, 0)),
                # Whole packed weights / bias: constant index -> VMEM-resident.
                pl.BlockSpec((n_head, C, 3 * hd), lambda b, i, h: (0, 0, 0)),
                pl.BlockSpec((n_head, 1, 3 * hd), lambda b, i, h: (0, 0, 0)),
            ],
            out_specs=(
                pl.BlockSpec((1, 1, tt, hd), lambda b, i, h: (b, h, i, 0)),
                pl.BlockSpec((1, 1, tt, hd), lambda b, i, h: (b, h, i, 0)),
                pl.BlockSpec((1, 1, tt, hd), lambda b, i, h: (b, h, i, 0)),
            )),
        compiler_params=pltpu.CompilerParams(
            dimension_semantics=("parallel", "parallel", "arbitrary"),
            vmem_limit_bytes=vmem1),
        cost_estimate=qkv_cost,
    )(x, w_heads, b_heads)

    # ---- kernel 2: flash attention + fused output projection ----
    def kv_idx(b, i, h, j):
        # Clamp to the last kv tile that can be causally visible from q-tile i;
        # fully-masked kv steps reuse the resident block and issue no DMA.
        return (b, h, jnp.minimum(j, (i * tq + tq - 1) // tk), 0)

    k2_resident = (w_proj.size + C) * jnp.dtype(w_proj.dtype).itemsize
    k2_stream = 2 * (tq * hd + 2 * tk * hd + tq * C) * itemsize
    k2_scratch = tq * (hd + C + 2) * 4
    vmem2 = int(min(max((k2_resident + k2_stream + k2_scratch) * 2, 32 << 20),
                    56 << 20))
    attn_cost = pl.CostEstimate(
        flops=4 * B * n_head * T_pad * T_pad * hd + 2 * B * T_pad * C * C,
        transcendentals=B * n_head * T_pad * T_pad // 2,
        bytes_accessed=int(itemsize * (2 * B * T_pad * C + B * nq * T_pad * C)
                           + k2_resident))
    out = pl.pallas_call(
        functools.partial(_flash_attn_kernel, q_tile=tq, kv_tile=tk,
                          n_head=n_head, head_dim=hd),
        out_shape=jax.ShapeDtypeStruct((B, T_pad, C), dtype),
        grid_spec=pltpu.PrefetchScalarGridSpec(
            num_scalar_prefetch=0,
            grid=(B, nq, n_head, nkv),
            in_specs=[
                pl.BlockSpec((1, 1, tq, hd), lambda b, i, h, j: (b, h, i, 0)),
                pl.BlockSpec((1, 1, tk, hd), kv_idx),
                pl.BlockSpec((1, 1, tk, hd), kv_idx),
                # Full W_proj / b_proj: constant index -> VMEM-resident.
                pl.BlockSpec((C, C), lambda b, i, h, j: (0, 0)),
                pl.BlockSpec((1, C), lambda b, i, h, j: (0, 0)),
            ],
            out_specs=pl.BlockSpec((1, tq, C), lambda b, i, h, j: (b, i, 0)),
            scratch_shapes=[
                pltpu.VMEM((tq, 1), jnp.float32),    # running max
                pltpu.VMEM((tq, 1), jnp.float32),    # running denom
                pltpu.VMEM((tq, hd), jnp.float32),   # per-head attention acc
                pltpu.VMEM((tq, C), jnp.float32),    # fused-projection acc
            ]),
        compiler_params=pltpu.CompilerParams(
            dimension_semantics=("parallel", "parallel", "arbitrary",
                                 "arbitrary"),
            vmem_limit_bytes=vmem2),
        cost_estimate=attn_cost,
    )(q, k, v, w_proj, b_proj2)

    if T_pad != T:
        out = out[:, :T, :]
    return out


def _reference(x, w_qkv, b_qkv, w_proj, b_proj, n_head):
    """Pure-JAX reference mirroring the PyTorch forward."""
    B, T, C = x.shape
    hd = C // n_head
    qkv = x @ w_qkv + b_qkv                               # (B, T, 3C)
    q, k, v = jnp.split(qkv, 3, axis=-1)

    def heads(t):
        return t.reshape(B, T, n_head, hd).transpose(0, 2, 1, 3)  # (B,nh,T,hd)

    q, k, v = heads(q), heads(k), heads(v)
    s = jnp.einsum("bhqd,bhkd->bhqk", q, k) / math.sqrt(hd)
    mask = jnp.tril(jnp.ones((T, T), dtype=bool))
    s = jnp.where(mask[None, None], s, -jnp.inf)
    p = jax.nn.softmax(s, axis=-1)
    y = jnp.einsum("bhqk,bhkd->bhqd", p, v)
    y = y.transpose(0, 2, 1, 3).reshape(B, T, C)
    return y @ w_proj + b_proj


if __name__ == "__main__":
    # Small shapes consistent with the module.
    B, T = 2, 8
    n_embd, n_head = 32, 4

    key = jax.random.PRNGKey(0)
    k1, k2, k3, k4, k5 = jax.random.split(key, 5)

    # Deterministic parameter init (nn.Linear-like scaling), stored as (in, out).
    lim_attn = 1.0 / math.sqrt(n_embd)
    w_qkv = jax.random.uniform(k1, (n_embd, 3 * n_embd), jnp.float32,
                               -lim_attn, lim_attn)
    b_qkv = jax.random.uniform(k2, (3 * n_embd,), jnp.float32,
                               -lim_attn, lim_attn)
    w_proj = jax.random.uniform(k3, (n_embd, n_embd), jnp.float32,
                                -lim_attn, lim_attn)
    b_proj = jax.random.uniform(k4, (n_embd,), jnp.float32, -lim_attn, lim_attn)

    x = jax.random.normal(k5, (B, T, n_embd), jnp.float32)

    out = causal_self_attention(x, w_qkv, b_qkv, w_proj, b_proj, n_head=n_head)
    out = jax.block_until_ready(out)

    ref = _reference(x, w_qkv, b_qkv, w_proj, b_proj, n_head)
    np.testing.assert_allclose(np.asarray(out), np.asarray(ref),
                               rtol=2e-3, atol=2e-3)
    print("KERNEL_OK")
</pallas_src>

<mosaic_0001>
module attributes {stable_mosaic.version = 11 : i64} {
  func.func @_qkv_proj_kernel(%arg0: i32, %arg1: i32, %arg2: i32, %arg3: memref<1x8x32xf32, #tpu.memory_space<vmem>>, %arg4: memref<4x32x24xf32, #tpu.memory_space<vmem>>, %arg5: memref<4x1x24xf32, #tpu.memory_space<vmem>>, %arg6: memref<1x1x8x8xf32, #tpu.memory_space<vmem>>, %arg7: memref<1x1x8x8xf32, #tpu.memory_space<vmem>>, %arg8: memref<1x1x8x8xf32, #tpu.memory_space<vmem>>) attributes {dimension_semantics = [#tpu.dimension_semantics<parallel>, #tpu.dimension_semantics<parallel>, #tpu.dimension_semantics<arbitrary>], iteration_bounds = array<i64: 2, 1, 4>, scalar_prefetch = 0 : i64, scratch_operands = 0 : i64, tpu.core_type = #tpu.core_type<tc>, window_params = [{transform_indices = @transform_0, window_bounds = array<i64: 1, 8, 32>}, {pipeline_mode = #tpu.pipeline_mode<synchronous>, transform_indices = @transform_1, window_bounds = array<i64: 4, 32, 24>}, {pipeline_mode = #tpu.pipeline_mode<synchronous>, transform_indices = @transform_2, window_bounds = array<i64: 4, 1, 24>}, {transform_indices = @transform_3, window_bounds = array<i64: 1, 1, 8, 8>}, {transform_indices = @transform_4, window_bounds = array<i64: 1, 1, 8, 8>}, {transform_indices = @transform_5, window_bounds = array<i64: 1, 1, 8, 8>}]} {
    %c0 = arith.constant 0 : index
    %c0_0 = arith.constant 0 : index
    %c0_1 = arith.constant 0 : index
    %0 = vector.load %arg3[%c0, %c0_0, %c0_1] : memref<1x8x32xf32, #tpu.memory_space<vmem>>, vector<1x8x32xf32>
    %1 = vector.shape_cast %0 : vector<1x8x32xf32> to vector<8x32xf32>
    %2 = arith.index_cast %arg2 : i32 to index
    %c0_2 = arith.constant 0 : index
    %c0_3 = arith.constant 0 : index
    %3 = vector.load %arg4[%2, %c0_2, %c0_3] : memref<4x32x24xf32, #tpu.memory_space<vmem>>, vector<1x32x24xf32>
    %4 = vector.shape_cast %3 : vector<1x32x24xf32> to vector<32x24xf32>
    %5 = arith.index_cast %arg2 : i32 to index
    %c0_4 = arith.constant 0 : index
    %c0_5 = arith.constant 0 : index
    %6 = vector.load %arg5[%5, %c0_4, %c0_5] : memref<4x1x24xf32, #tpu.memory_space<vmem>>, vector<1x1x24xf32>
    %7 = vector.shape_cast %6 : vector<1x1x24xf32> to vector<1x24xf32>
    %cst = arith.constant dense<0.000000e+00> : vector<8x24xf32>
    %8 = tpu.matmul %1, %4, %cst {dimension_numbers = #tpu.dot_dimension_numbers<[1], [0], [0], [1], [0, 0, 1, 1], [], []>} : vector<8x32xf32>, vector<32x24xf32>, vector<8x24xf32> -> vector<8x24xf32>
    %9 = vector.broadcast %7 : vector<1x24xf32> to vector<8x24xf32>
    %10 = arith.addf %8, %9 : vector<8x24xf32>
    %11 = vector.extract_strided_slice %10 {offsets = [0, 0], sizes = [8, 8], strides = [1, 1]} : vector<8x24xf32> to vector<8x8xf32>
    %c0_6 = arith.constant 0 : index
    %c0_7 = arith.constant 0 : index
    %c0_8 = arith.constant 0 : index
    %c0_9 = arith.constant 0 : index
    %12 = vector.load %arg6[%c0_6, %c0_7, %c0_8, %c0_9] : memref<1x1x8x8xf32, #tpu.memory_space<vmem>>, vector<1x1x8x8xf32>
    %13 = vector.shape_cast %12 : vector<1x1x8x8xf32> to vector<8x8xf32>
    %14 = vector.shape_cast %11 : vector<8x8xf32> to vector<1x1x8x8xf32>
    tpu.vector_store %arg6[%c0_6, %c0_7, %c0_8, %c0_9], %14 {strides = array<i32>} : memref<1x1x8x8xf32, #tpu.memory_space<vmem>>, vector<1x1x8x8xf32>,
    %15 = vector.extract_strided_slice %10 {offsets = [0, 8], sizes = [8, 8], strides = [1, 1]} : vector<8x24xf32> to vector<8x8xf32>
    %c0_10 = arith.constant 0 : index
    %c0_11 = arith.constant 0 : index
    %c0_12 = arith.constant 0 : index
    %c0_13 = arith.constant 0 : index
    %16 = vector.load %arg7[%c0_10, %c0_11, %c0_12, %c0_13] : memref<1x1x8x8xf32, #tpu.memory_space<vmem>>, vector<1x1x8x8xf32>
    %17 = vector.shape_cast %16 : vector<1x1x8x8xf32> to vector<8x8xf32>
    %18 = vector.shape_cast %15 : vector<8x8xf32> to vector<1x1x8x8xf32>
    tpu.vector_store %arg7[%c0_10, %c0_11, %c0_12, %c0_13], %18 {strides = array<i32>} : memref<1x1x8x8xf32, #tpu.memory_space<vmem>>, vector<1x1x8x8xf32>,
    %19 = vector.extract_strided_slice %10 {offsets = [0, 16], sizes = [8, 8], strides = [1, 1]} : vector<8x24xf32> to vector<8x8xf32>
    %c0_14 = arith.constant 0 : index
    %c0_15 = arith.constant 0 : index
    %c0_16 = arith.constant 0 : index
    %c0_17 = arith.constant 0 : index
    %20 = vector.load %arg8[%c0_14, %c0_15, %c0_16, %c0_17] : memref<1x1x8x8xf32, #tpu.memory_space<vmem>>, vector<1x1x8x8xf32>
    %21 = vector.shape_cast %20 : vector<1x1x8x8xf32> to vector<8x8xf32>
    %22 = vector.shape_cast %19 : vector<8x8xf32> to vector<1x1x8x8xf32>
    tpu.vector_store %arg8[%c0_14, %c0_15, %c0_16, %c0_17], %22 {strides = array<i32>} : memref<1x1x8x8xf32, #tpu.memory_space<vmem>>, vector<1x1x8x8xf32>,
    return
  }
  func.func @transform_0(%arg0: i32, %arg1: i32, %arg2: i32) -> (i32, i32, i32) {
    %c0_i32 = arith.constant 0 : i32
    %c0_i32_0 = arith.constant 0 : i32
    return %arg0, %arg1, %c0_i32 : i32, i32, i32
  }
  func.func @transform_1(%arg0: i32, %arg1: i32, %arg2: i32) -> (i32, i32, i32) {
    %c0_i32 = arith.constant 0 : i32
    %c0_i32_0 = arith.constant 0 : i32
    %c0_i32_1 = arith.constant 0 : i32
    %c0_i32_2 = arith.constant 0 : i32
    return %c0_i32, %c0_i32_0, %c0_i32_1 : i32, i32, i32
  }
  func.func @transform_2(%arg0: i32, %arg1: i32, %arg2: i32) -> (i32, i32, i32) {
    %c0_i32 = arith.constant 0 : i32
    %c0_i32_0 = arith.constant 0 : i32
    %c0_i32_1 = arith.constant 0 : i32
    %c0_i32_2 = arith.constant 0 : i32
    return %c0_i32, %c0_i32_0, %c0_i32_1 : i32, i32, i32
  }
  func.func @transform_3(%arg0: i32, %arg1: i32, %arg2: i32) -> (i32, i32, i32, i32) {
    %c0_i32 = arith.constant 0 : i32
    %c0_i32_0 = arith.constant 0 : i32
    return %arg0, %arg2, %arg1, %c0_i32 : i32, i32, i32, i32
  }
  func.func @transform_4(%arg0: i32, %arg1: i32, %arg2: i32) -> (i32, i32, i32, i32) {
    %c0_i32 = arith.constant 0 : i32
    %c0_i32_0 = arith.constant 0 : i32
    return %arg0, %arg2, %arg1, %c0_i32 : i32, i32, i32, i32
  }
  func.func @transform_5(%arg0: i32, %arg1: i32, %arg2: i32) -> (i32, i32, i32, i32) {
    %c0_i32 = arith.constant 0 : i32
    %c0_i32_0 = arith.constant 0 : i32
    return %arg0, %arg2, %arg1, %c0_i32 : i32, i32, i32, i32
  }
}

</mosaic_0001>

<llo_original>
// kernel: tpu_custom_call.1
$region0: #{tpu_custom_call.1}
  #allocation0 [shape = 'u32[]', space=smem, size = 0x4, offset = 0x4, fixed_abs, tag = 'smem constant byte address 0x4 - core index']
  #allocation1 [shape = 'u32[144,128]{1,0:T(1,128)}', space=vmem, size = 0x12000, scoped, tag = 'internal scratch']
  %s0 = inlined_call_operand.vmem [shape: f32[2,8,32], index: 0, kind: input, shape index: {}]
  %s1 = inlined_call_operand.vmem [shape: f32[4,32,24], index: 1, kind: input, shape index: {}]
  %s2 = inlined_call_operand.vmem [shape: f32[4,1,24], index: 2, kind: input, shape index: {}]
  %s3 = inlined_call_operand.hbm [shape: f32[2,4,8,8], index: 3, kind: output, shape index: {0}]
  %s4 = inlined_call_operand.hbm [shape: f32[2,4,8,8], index: 4, kind: output, shape index: {1}]
  %s5 = inlined_call_operand.hbm [shape: f32[2,4,8,8], index: 5, kind: output, shape index: {2}]
  %6 = xla_tuple %s3, %s4, %s5
  %s7 = sld [smem:[#allocation0]]
  $region61: #{tpu_custom_call.1} parent=0
    _
  %s9 = ssub.s32 1, %s7
  %s10 = scalar_select 0, %s9, %s7
  $region1: #{tpu_custom_call.1} parent=0
    #allocation2 [shape = 'u8[8192]{0}', space=vmem, size = 0x2000, scoped, tag = 'output window, operand 0']
    #allocation3 [shape = 's32[2]{0}', space=sflag, size = 0x8, scoped, tag = 'scoped memory for tpu_custom_call.1']
    #allocation4 [shape = 'u8[8192]{0}', space=vmem, size = 0x2000, scoped, tag = 'output window, operand 1']
    #allocation5 [shape = 's32[2]{0}', space=sflag, size = 0x8, scoped, tag = 'scoped memory for tpu_custom_call.1']
    #allocation6 [shape = 'u8[8192]{0}', space=vmem, size = 0x2000, scoped, tag = 'output window, operand 2']
    %11 = vsyncpa [#allocation3], 0
    %s12 = scalar_lea.sflag [#allocation3], 1
    %13 = vsyncpa %s12, 0
    %14 = vsyncpa [#allocation5], 0
    %s15 = scalar_lea.sflag [#allocation5], 1
    %16 = vsyncpa %s15, 0
    loop: start=0, step=1, limit=10
    $region2: #{tpu_custom_call.1} parent=1 // loop_pre_header
      _
    $region3: #{tpu_custom_call.1} parent=1 // loop_header
      %s18 = sphi 0, %s22
      %p19 = scmp.ge.s32.totalorder %s18, 10
      %s25 = sphi 0, %s44
      %s26 = sphi 0, %s40
      %s27 = sphi 0, %s36
      %s28 = sphi 0, %s25
      %s29 = sphi 0, %s26
      %s30 = sphi 0, %s27
      %s31 = sphi 0, %s28
      %s32 = sphi 0, %s29
      %s33 = sphi 0, %s30
      %s49 = sphi 0, %s51
      %s52 = sphi 0, %s49
      %s53 = sphi 0, %s52
      %s69 = sphi 0, %s53
      %s73 = sphi 0, %s73
      %s75 = sphi 0, %s73
      %s76 = sphi 0, %s75
      %s90 = sphi 0, %s76
      %s94 = sphi 0, %s94
      %s96 = sphi 0, %s94
      %s97 = sphi 0, %s96
      %s111 = sphi 0, %s97
      %s121 = sphi 0, %s123
      %s124 = sphi 0, %s121
      %s125 = sphi 0, %s124
      %s141 = sphi 0, %s125
      %s151 = sphi 0, %s153
      %s154 = sphi 0, %s151
      %s155 = sphi 0, %s154
      %s171 = sphi 0, %s155
      %s181 = sphi 0, %s183
      %s184 = sphi 0, %s181
      %s185 = sphi 0, %s184
      %s201 = sphi 0, %s185
    $region4: #{tpu_custom_call.1} parent=1 // loop_header_branch
      %21 = sbr.rel (%p19) target = $region8
    $region5: #{tpu_custom_call.1} parent=1 // loop_body
      %s23 = ssub.s32 %s18, 1
      %s24 = ssub.s32 %s18, 2
      %s34 = sadd.s32 1, %s27
      %p35 = scmp.ge.s32.totalorder %s34, 4
      %s36 = scalar_select %p35, 0, %s34
      %s37 = sadd.s32 1, %s26
      %s38 = scalar_select %p35, %s37, %s26
      %p39 = scmp.ge.s32.totalorder %s38, 1
      %s40 = scalar_select %p39, 0, %s38
      %s41 = sadd.s32 1, %s25
      %s42 = scalar_select %p39, %s41, %s25
      %p43 = scmp.ge.s32.totalorder %s42, 2
      %s44 = scalar_select %p43, 0, %s42
      %s45 = ssub.s32 %s25, %s44
      %s46 = ssub.s32 %s26, %s40
      %s47 = sor.u32 %s45, %s46
      %p48 = scmp.eq.s32.totalorder %s47, 0
      %s50 = sadd.s32 %s49, 1
      %s51 = scalar_select %p48, %s49, %s50
      %p54 = pneg %p48
      %p55 = scmp.eq.s32.totalorder %s18, 7
      %p56 = por %p54, %p55
      %p57 = scmp.ne.s32.totalorder %s49, %s52
      %p58 = scmp.eq.s32.totalorder %s18, 0
      %p59 = por %p57, %p58
      %p60 = scmp.ne.s32.totalorder %s49, %s52
      %p61 = scmp.eq.s32.totalorder %s23, 7
      %p62 = por %p60, %p61
      %p63 = scmp.ne.s32.totalorder %s52, %s53
      %p64 = scmp.eq.s32.totalorder %s23, 0
      %p65 = por %p63, %p64
      %p66 = scmp.ne.s32.totalorder %s52, %s53
      %p67 = scmp.eq.s32.totalorder %s24, 7
      %p68 = por %p66, %p67
      %p70 = scmp.ne.s32.totalorder %s53, %s69
      %p71 = scmp.eq.s32.totalorder %s24, 0
      %p72 = por %p70, %p71
      %s74 = sadd.s32 %s73, 1
      %p77 = scmp.eq.s32.totalorder %s18, 7
      %p78 = scmp.ne.s32.totalorder %s73, %s75
      %p79 = scmp.eq.s32.totalorder %s18, 0
      %p80 = por %p78, %p79
      %p81 = scmp.ne.s32.totalorder %s73, %s75
      %p82 = scmp.eq.s32.totalorder %s23, 7
      %p83 = por %p81, %p82
      %p84 = scmp.ne.s32.totalorder %s75, %s76
      %p85 = scmp.eq.s32.totalorder %s23, 0
      %p86 = por %p84, %p85
      %p87 = scmp.ne.s32.totalorder %s75, %s76
      %p88 = scmp.eq.s32.totalorder %s24, 7
      %p89 = por %p87, %p88
      %p91 = scmp.ne.s32.totalorder %s76, %s90
      %p92 = scmp.eq.s32.totalorder %s24, 0
      %p93 = por %p91, %p92
      %s95 = sadd.s32 %s94, 1
      %p98 = scmp.eq.s32.totalorder %s18, 7
      %p99 = scmp.ne.s32.totalorder %s94, %s96
      %p100 = scmp.eq.s32.totalorder %s18, 0
      %p101 = por %p99, %p100
      %p102 = scmp.ne.s32.totalorder %s94, %s96
      %p103 = scmp.eq.s32.totalorder %s23, 7
      %p104 = por %p102, %p103
      %p105 = scmp.ne.s32.totalorder %s96, %s97
      %p106 = scmp.eq.s32.totalorder %s23, 0
      %p107 = por %p105, %p106
      %p108 = scmp.ne.s32.totalorder %s96, %s97
      %p109 = scmp.eq.s32.totalorder %s24, 7
      %p110 = por %p108, %p109
      %p112 = scmp.ne.s32.totalorder %s97, %s111
      %p113 = scmp.eq.s32.totalorder %s24, 0
      %p114 = por %p112, %p113
      %s115 = ssub.s32 %s25, %s44
      %s116 = ssub.s32 %s27, %s36
      %s117 = sor.u32 %s115, %s116
      %s118 = ssub.s32 %s26, %s40
      %s119 = sor.u32 %s117, %s118
      %p120 = scmp.eq.s32.totalorder %s119, 0
      %s122 = sadd.s32 %s121, 1
      %s123 = scalar_select %p120, %s121, %s122
      %p126 = pneg %p120
      %p127 = scmp.eq.s32.totalorder %s18, 7
      %p128 = por %p126, %p127
      %p129 = scmp.ne.s32.totalorder %s121, %s124
      %p130 = scmp.eq.s32.totalorder %s18, 0
      %p131 = por %p129, %p130
      %p132 = scmp.ne.s32.totalorder %s121, %s124
      %p133 = scmp.eq.s32.totalorder %s23, 7
      %p134 = por %p132, %p133
      %p135 = scmp.ne.s32.totalorder %s124, %s125
      %p136 = scmp.eq.s32.totalorder %s23, 0
      %p137 = por %p135, %p136
      %p138 = scmp.ne.s32.totalorder %s124, %s125
      %p139 = scmp.eq.s32.totalorder %s24, 7
      %p140 = por %p138, %p139
      %p142 = scmp.ne.s32.totalorder %s125, %s141
      %p143 = scmp.eq.s32.totalorder %s24, 0
      %p144 = por %p142, %p143
      %s145 = ssub.s32 %s25, %s44
      %s146 = ssub.s32 %s27, %s36
      %s147 = sor.u32 %s145, %s146
      %s148 = ssub.s32 %s26, %s40
      %s149 = sor.u32 %s147, %s148
      %p150 = scmp.eq.s32.totalorder %s149, 0
      %s152 = sadd.s32 %s151, 1
      %s153 = scalar_select %p150, %s151, %s152
      %p156 = pneg %p150
      %p157 = scmp.eq.s32.totalorder %s18, 7
      %p158 = por %p156, %p157
      %p159 = scmp.ne.s32.totalorder %s151, %s154
      %p160 = scmp.eq.s32.totalorder %s18, 0
      %p161 = por %p159, %p160
      %p162 = scmp.ne.s32.totalorder %s151, %s154
      %p163 = scmp.eq.s32.totalorder %s23, 7
      %p164 = por %p162, %p163
      %p165 = scmp.ne.s32.totalorder %s154, %s155
      %p166 = scmp.eq.s32.totalorder %s23, 0
      %p167 = por %p165, %p166
      %p168 = scmp.ne.s32.totalorder %s154, %s155
      %p169 = scmp.eq.s32.totalorder %s24, 7
      %p170 = por %p168, %p169
      %p172 = scmp.ne.s32.totalorder %s155, %s171
      %p173 = scmp.eq.s32.totalorder %s24, 0
      %p174 = por %p172, %p173
      %s175 = ssub.s32 %s25, %s44
      %s176 = ssub.s32 %s27, %s36
      %s177 = sor.u32 %s175, %s176
      %s178 = ssub.s32 %s26, %s40
      %s179 = sor.u32 %s177, %s178
      %p180 = scmp.eq.s32.totalorder %s179, 0
      %s182 = sadd.s32 %s181, 1
      %s183 = scalar_select %p180, %s181, %s182
      %p186 = pneg %p180
      %p187 = scmp.eq.s32.totalorder %s18, 7
      %p188 = por %p186, %p187
      %p189 = scmp.ne.s32.totalorder %s181, %s184
      %p190 = scmp.eq.s32.totalorder %s18, 0
      %p191 = por %p189, %p190
      %p192 = scmp.ne.s32.totalorder %s181, %s184
      %p193 = scmp.eq.s32.totalorder %s23, 7
      %p194 = por %p192, %p193
      %p195 = scmp.ne.s32.totalorder %s184, %s185
      %p196 = scmp.eq.s32.totalorder %s23, 0
      %p197 = por %p195, %p196
      %p198 = scmp.ne.s32.totalorder %s184, %s185
      %p199 = scmp.eq.s32.totalorder %s24, 7
      %p200 = por %p198, %p199
      %p202 = scmp.ne.s32.totalorder %s185, %s201
      %p203 = scmp.eq.s32.totalorder %s24, 0
      %p204 = por %p202, %p203
      %p205 = scmp.le.s32.totalorder 1, %s18
      %p206 = scmp.lt.s32.totalorder %s18, 9
      %p207 = pnand %p205, %p206
      %p208 = pneg %p207
      // Predicated region
      $region9: #{tpu_custom_call.1} parent=5 // pred_check
        _
      $region10: #{tpu_custom_call.1} parent=5 // pred_check_branch
        %210 = sbr.rel (%p207) target = $region12
      $region11: #{tpu_custom_call.1} parent=5 // pred_region
        %s211 = ssub.s32 %s18, 1
        // Predicated region
        $region13: #{tpu_custom_call.1} parent=11 // pred_check
          %p212 = pneg %p86
        $region14: #{tpu_custom_call.1} parent=11 // pred_check_branch
          %214 = sbr.rel (%p212) target = $region16
        $region15: #{tpu_custom_call.1} parent=11 // pred_region
          _
        $region16: #{tpu_custom_call.1} parent=11 // pred_fallthru
          _
        // Predicated region
        $region17: #{tpu_custom_call.1} parent=11 // pred_check
          %p215 = pneg %p107
        $region18: #{tpu_custom_call.1} parent=11 // pred_check_branch
          %217 = sbr.rel (%p215) target = $region20
        $region19: #{tpu_custom_call.1} parent=11 // pred_region
          _
        $region20: #{tpu_custom_call.1} parent=11 // pred_fallthru
          _
      $region12: #{tpu_custom_call.1} parent=5 // pred_fallthru
        _
      %p218 = scmp.lt.s32.totalorder %s18, 8
      // Predicated region
      $region21: #{tpu_custom_call.1} parent=5 // pred_check
        %p219 = pneg %p218
      $region22: #{tpu_custom_call.1} parent=5 // pred_check_branch
        %221 = sbr.rel (%p219) target = $region24
      $region23: #{tpu_custom_call.1} parent=5 // pred_region
        // Predicated region
        $region25: #{tpu_custom_call.1} parent=23 // pred_check
          %p222 = pneg %p59
        $region26: #{tpu_custom_call.1} parent=23 // pred_check_branch
          %224 = sbr.rel (%p222) target = $region28
        $region27: #{tpu_custom_call.1} parent=23 // pred_region
          %p225 = scmp.lt.s32.totalorder %s25, 1
          %s226 = scalar_select %p225, %s25, 1
          %p227 = scmp.lt.s32.totalorder %s26, 0
          %s228 = scalar_select %p227, %s26, 0
          %s229 = sadd.s32 %s228, %s226
          %s230 = smul.addr %s229, 8
          %s231 = scalar_lea.vmem %s0, %s230
        $region28: #{tpu_custom_call.1} parent=23 // pred_fallthru
          _
      $region24: #{tpu_custom_call.1} parent=5 // pred_fallthru
        _
      %p232 = scmp.le.s32.totalorder 1, %s18
      %p233 = scmp.lt.s32.totalorder %s18, 9
      %p234 = pnand %p232, %p233
      %p235 = pneg %p234
      // Predicated region
      $region29: #{tpu_custom_call.1} parent=5 // pred_check
        _
      $region30: #{tpu_custom_call.1} parent=5 // pred_check_branch
        %237 = sbr.rel (%p234) target = $region32
      $region31: #{tpu_custom_call.1} parent=5 // pred_region
        %s238 = ssub.s32 %s18, 1
        %p239 = scmp.lt.s32.totalorder %s28, 1
        %s240 = scalar_select %p239, %s28, 1
        %p241 = scmp.lt.s32.totalorder %s29, 0
        %s242 = scalar_select %p241, %s29, 0
        %s243 = sadd.s32 %s242, %s240
        %s244 = smul.addr %s243, 8
        %s245 = scalar_lea.vmem %s0, %s244
        %p246 = pneg %p65
        %p247 = pneg %p62
        %p248 = pneg %p86
        %p249 = pneg %p83
        %p250 = pneg %p107
        %p251 = pneg %p104
        %p252 = pneg %p137
        %p253 = pneg %p134
        %s254 = sand.u32 %s124, 1
        %s255 = scalar_lea.sflag [#allocation3], %s254
        %s256 = sand.u32 %s124, 1
        %s257 = smul.addr %s256, 8
        %s258 = scalar_lea.vmem [#allocation2], %s257
        %p259 = pneg %p167
        %p260 = pneg %p164
        %s261 = sand.u32 %s23, 1
        %s262 = scalar_lea.sflag [#allocation5], %s261
        %s263 = sand.u32 %s154, 1
        %s264 = smul.addr %s263, 8
        %s265 = scalar_lea.vmem [#allocation4], %s264
        %p266 = pneg %p197
        %p267 = pneg %p194
        %s268 = sand.u32 %s23, 1
        %s269 = scalar_lea.sflag [#allocation5], %s268
        %s270 = sand.u32 %s184, 1
        %s271 = smul.addr %s270, 8
        %s272 = scalar_lea.vmem [#allocation6], %s271
        %p273 = scmp.lt.s32.totalorder %s28, 1
        %s274 = scalar_select %p273, %s28, 1
        %p275 = scmp.lt.s32.totalorder %s29, 0
        %s276 = scalar_select %p275, %s29, 0
        %s277 = sadd.s32 %s276, %s274
        %s278 = smul.addr %s277, 8
        %s279 = scalar_lea.vmem %s0, %s278
        %v280 = vld [vmem:[%s279] sm:$0xff]
        %s281 = smul.u32 %s30, 32
        %s282 = scalar_lea.vmem %s1, %s281
        %v283 = vld [vmem:[%s282] sm:$0xff]
        %v284 = vld [vmem:[%s282 + $0x8] sm:$0xff]
        %v285 = vld [vmem:[%s282 + $0x10] sm:$0xff]
        %v286 = vld [vmem:[%s282 + $0x18] sm:$0xff]
        %s287 = scalar_lea.vmem %s2, %s30
        %v288 = vld [vmem:[%s287] sm:$0x1]
        %v290 = vlaneseq
        %v291 = vshrl.u32 %v290, 7
        %v292 = vsub.s32 0, %v291
        %v293 = vrot.slane %v288, %v292
        %vm295 = vcmask 261120
        %v297 = vsel %vm295, %v280, 0
        %299 = vmatprep.subr.mxu0 0.0
        %300 = vmatpush1.msra.mxu0 0.0
        %301 = vmatprep.subr.mxu0 0.0
        %302 = vmatpush1.msra.mxu0 0.0
        %303 = vmatprep.subr.mxu0 0.0
        %304 = vmatpush1.msra.mxu0 0.0
        %305 = vmatprep.subr.mxu0 0.0
        %306 = vmatpush1.msra.mxu0 0.0
        %307 = vmatprep.subr.mxu0 0.0
        %308 = vmatpush1.msra.mxu0 0.0
        %309 = vmatprep.subr.mxu0 0.0
        %310 = vmatpush1.msra.mxu0 0.0
        %311 = vmatprep.subr.mxu0 0.0
        %312 = vmatpush1.msra.mxu0 0.0
        %313 = vmatprep.subr.mxu0 0.0
        %314 = vmatpush1.msra.mxu0 0.0
        %315 = vmatprep.subr.mxu0 0.0
        %316 = vmatpush1.msra.mxu0 0.0
        %317 = vmatprep.subr.mxu0 0.0
        %318 = vmatpush1.msra.mxu0 0.0
        %319 = vmatprep.subr.mxu0 0.0
        %320 = vmatpush1.msra.mxu0 0.0
        %321 = vmatprep.subr.mxu0 0.0
        %322 = vmatpush1.msra.mxu0 0.0
        %323 = vmatprep.subr.mxu0 0.0
        %324 = vmatpush1.msra.mxu0 %v286
        %325 = vmatprep.subr.mxu0 0.0
        %326 = vmatpush1.msra.mxu0 %v285
        %327 = vmatprep.subr.mxu0 0.0
        %328 = vmatpush1.msra.mxu0 %v284
        %329 = vmatprep.subr.mxu0 0.0
        %330 = vmatpush1.msra.mxu0 %v283
        %331 = vmatprep.subr.mxu0 0.0
        %332 = vmatpush2.msra.mxu0 0.0
        %333 = vmatprep.subr.mxu0 0.0
        %334 = vmatpush2.msra.mxu0 0.0
        %335 = vmatprep.subr.mxu0 0.0
        %336 = vmatpush2.msra.mxu0 0.0
        %337 = vmatprep.subr.mxu0 0.0
        %338 = vmatpush2.msra.mxu0 0.0
        %339 = vmatprep.subr.mxu0 0.0
        %340 = vmatpush2.msra.mxu0 0.0
        %341 = vmatprep.subr.mxu0 0.0
        %342 = vmatpush2.msra.mxu0 0.0
        %343 = vmatprep.subr.mxu0 0.0
        %344 = vmatpush2.msra.mxu0 0.0
        %345 = vmatprep.subr.mxu0 0.0
        %346 = vmatpush2.msra.mxu0 0.0
        %347 = vmatprep.subr.mxu0 0.0
        %348 = vmatpush2.msra.mxu0 0.0
        %349 = vmatprep.subr.mxu0 0.0
        %350 = vmatpush2.msra.mxu0 0.0
        %351 = vmatprep.subr.mxu0 0.0
        %352 = vmatpush2.msra.mxu0 0.0
        %353 = vmatprep.subr.mxu0 0.0
        %354 = vmatpush2.msra.mxu0 0.0
        %355 = vmatprep.subr.mxu0 0.0
        %356 = vmatpush2.msra.mxu0 0.0
        %357 = vmatprep.subr.mxu0 0.0
        %358 = vmatpush2.msra.mxu0 0.0
        %359 = vmatprep.subr.mxu0 0.0
        %360 = vmatpush2.msra.mxu0 0.0
        %361 = vmatprep.subr.mxu0 0.0
        %362 = vmatpush2.msra.mxu0 0.0
        %363 = vmatprep.mubr.f32.mxu0 0.0
        %364 = vmatmul.mubr.f32.gmra.mxu0 %v297
        %v365 = vpop.f32.mrf.mxu0
        %v366 = vadd.f32 %v293, %v365
        %v367 = vpop.f32.mrf.mxu0
        %368 = vdwg.mxu0
        %vm369 = vcmask 64512
        %370 = vst.msk [vmem:[%s258] sm:$0xff] %vm369, %v366
        %372 = vrot.lane.b32.xlu0 %v366, 120
        %v373 = vpop.permute.xlu0 %372
        %375 = vst.msk [vmem:[%s265] sm:$0xff] %vm369, %v373
        %376 = vrot.lane.b32.xlu0 %v366, 112
        %v377 = vpop.permute.xlu0 %376
        %379 = vst.msk [vmem:[%s272] sm:$0xff] %vm369, %v377
        %s380 = sand.u32 %s124, 1
        %s381 = scalar_lea.sflag [#allocation3], %s380
        %s382 = sand.u32 %s124, 1
        %s383 = smul.addr %s382, 8
        %s384 = scalar_lea.vmem [#allocation2], %s383
        %s385 = sand.u32 %s23, 1
        %s386 = scalar_lea.sflag [#allocation5], %s385
        %s387 = sand.u32 %s154, 1
        %s388 = smul.addr %s387, 8
        %s389 = scalar_lea.vmem [#allocation4], %s388
        %s390 = sand.u32 %s23, 1
        %s391 = scalar_lea.sflag [#allocation5], %s390
        %s392 = sand.u32 %s184, 1
        %s393 = smul.addr %s392, 8
        %s394 = scalar_lea.vmem [#allocation6], %s393
        // Predicated region
        $region33: #{tpu_custom_call.1} parent=31 // pred_check
          %p395 = pneg %p134
        $region34: #{tpu_custom_call.1} parent=31 // pred_check_branch
          %397 = sbr.rel (%p395) target = $region36
        $region35: #{tpu_custom_call.1} parent=31 // pred_region
          %s399 = ssub.s32 128, 128
          %400 = vsyncadd %s381, %s399
          %s401 = sadd.s32 %s29, %s30
          %s402 = smul.addr %s28, 4
          %s403 = sadd.s32 %s401, %s402
          %s404 = smul.addr %s403, 128
          %s405 = scalar_lea.hbm %s3, %s404
          %s407 = sshll.u32 %s384, 4
          %s408 = int_to_ptr.vmem [resolvable:$true] %s407
          %410 = dma.vmem_to_hbm [thread:$0]  %s408, 128, %s405, %s381
        $region36: #{tpu_custom_call.1} parent=31 // pred_fallthru
          _
        // Predicated region
        $region37: #{tpu_custom_call.1} parent=31 // pred_check
          %p411 = pneg %p164
        $region38: #{tpu_custom_call.1} parent=31 // pred_check_branch
          %413 = sbr.rel (%p411) target = $region40
        $region39: #{tpu_custom_call.1} parent=31 // pred_region
          %s415 = ssub.s32 128, 128
          %416 = vsyncadd %s386, %s415
          %s417 = sadd.s32 %s29, %s30
          %s418 = smul.addr %s28, 4
          %s419 = sadd.s32 %s417, %s418
          %s420 = smul.addr %s419, 128
          %s421 = scalar_lea.hbm %s4, %s420
          %s423 = sshll.u32 %s389, 4
          %s424 = int_to_ptr.vmem [resolvable:$true] %s423
          %426 = dma.vmem_to_hbm [thread:$0]  %s424, 128, %s421, %s386
        $region40: #{tpu_custom_call.1} parent=31 // pred_fallthru
          _
        // Predicated region
        $region41: #{tpu_custom_call.1} parent=31 // pred_check
          %p427 = pneg %p194
        $region42: #{tpu_custom_call.1} parent=31 // pred_check_branch
          %429 = sbr.rel (%p427) target = $region44
        $region43: #{tpu_custom_call.1} parent=31 // pred_region
          %s431 = ssub.s32 128, 128
          %432 = vsyncadd %s391, %s431
          %s433 = sadd.s32 %s29, %s30
          %s434 = smul.addr %s28, 4
          %s435 = sadd.s32 %s433, %s434
          %s436 = smul.addr %s435, 128
          %s437 = scalar_lea.hbm %s5, %s436
          %s439 = sshll.u32 %s394, 4
          %s440 = int_to_ptr.vmem [resolvable:$true] %s439
          %442 = dma.vmem_to_hbm [thread:$0]  %s440, 128, %s437, %s391
        $region44: #{tpu_custom_call.1} parent=31 // pred_fallthru
          _
      $region32: #{tpu_custom_call.1} parent=5 // pred_fallthru
        _
      %p443 = scmp.le.s32.totalorder 2, %s18
      // Predicated region
      $region45: #{tpu_custom_call.1} parent=5 // pred_check
        %p444 = pneg %p443
      $region46: #{tpu_custom_call.1} parent=5 // pred_check_branch
        %446 = sbr.rel (%p444) target = $region48
      $region47: #{tpu_custom_call.1} parent=5 // pred_region
        %s447 = ssub.s32 %s18, 2
        // Predicated region
        $region49: #{tpu_custom_call.1} parent=47 // pred_check
          %p448 = pneg %p140
        $region50: #{tpu_custom_call.1} parent=47 // pred_check_branch
          %450 = sbr.rel (%p448) target = $region52
        $region51: #{tpu_custom_call.1} parent=47 // pred_region
          %s451 = sand.u32 %s125, 1
          %s452 = scalar_lea.sflag [#allocation3], %s451
          %s453 = sand.u32 %s125, 1
          %s454 = smul.addr %s453, 8
          %s455 = scalar_lea.vmem [#allocation2], %s454
          %456 = dma.done %s452, 128
        $region52: #{tpu_custom_call.1} parent=47 // pred_fallthru
          _
        // Predicated region
        $region53: #{tpu_custom_call.1} parent=47 // pred_check
          %p457 = pneg %p170
        $region54: #{tpu_custom_call.1} parent=47 // pred_check_branch
          %459 = sbr.rel (%p457) target = $region56
        $region55: #{tpu_custom_call.1} parent=47 // pred_region
          %s460 = sand.u32 %s24, 1
          %s461 = scalar_lea.sflag [#allocation5], %s460
          %s462 = sand.u32 %s155, 1
          %s463 = smul.addr %s462, 8
          %s464 = scalar_lea.vmem [#allocation4], %s463
          %465 = dma.done %s461, 128
        $region56: #{tpu_custom_call.1} parent=47 // pred_fallthru
          _
        // Predicated region
        $region57: #{tpu_custom_call.1} parent=47 // pred_check
          %p466 = pneg %p200
        $region58: #{tpu_custom_call.1} parent=47 // pred_check_branch
          %468 = sbr.rel (%p466) target = $region60
        $region59: #{tpu_custom_call.1} parent=47 // pred_region
          %s469 = sand.u32 %s24, 1
          %s470 = scalar_lea.sflag [#allocation5], %s469
          %s471 = sand.u32 %s185, 1
          %s472 = smul.addr %s471, 8
          %s473 = scalar_lea.vmem [#allocation6], %s472
          %474 = dma.done %s470, 128
        $region60: #{tpu_custom_call.1} parent=47 // pred_fallthru
          _
      $region48: #{tpu_custom_call.1} parent=5 // pred_fallthru
        _
    $region6: #{tpu_custom_call.1} parent=1 // loop_footer
      %s22 = sadd.s32 1, %s18
    $region7: #{tpu_custom_call.1} parent=1 // loop_footer_branch
      %17 = sbr.rel target = $region3
    $region8: #{tpu_custom_call.1} parent=1 // loop_exit
      _
    %475 = vsyncpa [#allocation3], 1
    %s476 = scalar_lea.sflag [#allocation3], 1
    %477 = vsyncpa %s476, 1
    %478 = vsyncpa [#allocation5], 1
    %s479 = scalar_lea.sflag [#allocation5], 1
    %480 = vsyncpa %s479, 1

</llo_original>
